<compile_context>
chip_gen: v5e
topology: v5e:2x2
jax: 0.10.0
libtpu: 0.0.40
codegen_flags: <defaults>
</compile_context>

<pallas_src>
import jax
import jax.numpy as jnp
from jax.experimental import pallas as pl
from jax.experimental.pallas import tpu as pltpu

# ----------------------- model hyper-parameters (from the module) -----------
HIDDEN_SIZE = 2
INPUT_SIZE = 1
NUM_CLASSES = 1
NUM_LAYERS = 1   # blitz BayesianLSTM here is single-layer
SEQ_LENGTH = 4
BATCH = 2

H = HIDDEN_SIZE
H4 = 4 * HIDDEN_SIZE
B = BATCH
T = SEQ_LENGTH
C = NUM_CLASSES

# --------------- packed-slab layout: one (8,128) f32 VMEM input -------------
# row layout (sublanes):
#   rows [ROW_X,   ROW_X+B)   : x            (B, T)        lanes [0, T)
#   row   ROW_WIH             : W_ih         (1, 4H)       lanes [0, 4H)
#   rows [ROW_WHH, ROW_WHH+H) : W_hh         (H, 4H)       lanes [0, 4H)
#   row   ROW_BIAS            : combined b   (1, 4H)       lanes [0, 4H)
#                               fc bias      (1, C)        lanes [4H, 4H+C)
#   rows [ROW_WFC, ROW_WFC+H) : W_fc         (H, C)        lanes [0, C)
ROW_X = 0
ROW_WIH = ROW_X + B
ROW_WHH = ROW_WIH + 1
ROW_BIAS = ROW_WHH + H
ROW_WFC = ROW_BIAS + 1
N_ROWS = ROW_WFC + H

SLAB_SUBLANES = 8
SLAB_LANES = 128
assert N_ROWS <= SLAB_SUBLANES, (N_ROWS, SLAB_SUBLANES)
assert max(T, H4 + C) <= SLAB_LANES


# ----------------------------- Pallas kernel --------------------------------
def bayesian_nn_kernel(slab_ref, out_ref):
    """LSTM recurrence over seq_len + last-step Linear head.

    slab_ref : (8, 128) f32  packed parameters + inputs (layout above)
    out_ref  : (B, C)   f32
    """
    slab = slab_ref[...]                              # single unmasked vreg load

    x_all = slab[ROW_X:ROW_X + B, 0:T]                # (B, T)
    w_ih = slab[ROW_WIH:ROW_WIH + 1, 0:H4]            # (1, 4H)
    w_hh = slab[ROW_WHH:ROW_WHH + H, 0:H4]            # (H, 4H)
    bias = slab[ROW_BIAS:ROW_BIAS + 1, 0:H4]          # (1, 4H)  (b_ih + b_hh)
    b_fc = slab[ROW_BIAS:ROW_BIAS + 1, H4:H4 + C]     # (1, C)
    w_fc = slab[ROW_WFC:ROW_WFC + H, 0:C]             # (H, C)

    # Hoisted loop-invariant broadcasts (done once; JAX does not CSE
    # broadcast_in_dim, so doing these inside the unrolled loop repeats them).
    w_ih_b = jnp.broadcast_to(w_ih, (B, H4))
    bias_b = jnp.broadcast_to(bias, (B, H4))
    w_hh_rows = [jnp.broadcast_to(w_hh[j:j + 1, :], (B, H4)) for j in range(H)]
    w_fc_rows = [jnp.broadcast_to(w_fc[j:j + 1, :], (B, C)) for j in range(H)]
    b_fc_b = jnp.broadcast_to(b_fc, (B, C))

    # Hoisted input projection: independent of h/c, so it sits off the serial
    # dependence chain of the recurrence (input_size == 1 => just a bcast-mul).
    x_proj = [x_all[:, t:t + 1] * w_ih_b + bias_b for t in range(T)]   # (B,4H) each

    h = jnp.zeros((B, H), dtype=jnp.float32)
    c = jnp.zeros((B, H), dtype=jnp.float32)

    # Static (small, fixed) sequence loop -> fully unrolled recurrence.
    for t in range(T):
        # h @ W_hh as explicit VPU broadcast-FMAs (no MXU on the critical path).
        rec = h[:, 0:1] * w_hh_rows[0]
        for j in range(1, H):
            rec = rec + h[:, j:j + 1] * w_hh_rows[j]
        gates = x_proj[t] + rec                        # (B, 4H)

        # Whole-vreg activations: 2 EUP ops/step. Gate order [i, f, g, o].
        sig = jax.nn.sigmoid(gates)
        tnh = jnp.tanh(gates)
        i_g = sig[:, 0 * H:1 * H]
        f_g = sig[:, 1 * H:2 * H]
        g_g = tnh[:, 2 * H:3 * H]
        o_g = sig[:, 3 * H:4 * H]

        c = f_g * c + i_g * g_g
        h = o_g * jnp.tanh(c)

    # lstm_out[:, -1, :] == final h  ->  fc head, again as VPU FMA.
    out = b_fc_b
    for j in range(H):
        out = out + h[:, j:j + 1] * w_fc_rows[j]
    out_ref[...] = out


# --------------------- Bayesian parameter sampling (blitz-style) ------------
def sample_bayesian_weight(key, shape, mu_std=0.1, rho_init=-6.0):
    """Reparameterized sample: w = mu + softplus(rho) * eps."""
    k_mu, k_eps = jax.random.split(key)
    mu = mu_std * jax.random.normal(k_mu, shape, dtype=jnp.float32)
    sigma = jnp.log1p(jnp.exp(jnp.float32(rho_init)))
    eps = jax.random.normal(k_eps, shape, dtype=jnp.float32)
    return mu + sigma * eps


def make_params(key):
    k_ih, k_hh, k_b, k_fcw, k_fcb = jax.random.split(key, 5)
    w_ih = sample_bayesian_weight(k_ih, (INPUT_SIZE, H4))
    w_hh = sample_bayesian_weight(k_hh, (H, H4))
    b = sample_bayesian_weight(k_b, (1, H4))
    # nn.Linear(hidden, num_classes) default init: U(-1/sqrt(fan_in), +..)
    bound = 1.0 / jnp.sqrt(jnp.float32(H))
    w_fc = jax.random.uniform(k_fcw, (H, C), minval=-bound, maxval=bound,
                              dtype=jnp.float32)
    b_fc = jax.random.uniform(k_fcb, (1, C), minval=-bound, maxval=bound,
                              dtype=jnp.float32)
    return w_ih, w_hh, b, w_fc, b_fc


def pack_slab(x2, w_ih, w_hh, b, w_fc, b_fc):
    """Pack everything into one (8, 128) f32 slab -> single kernel DMA."""
    slab = jnp.zeros((SLAB_SUBLANES, SLAB_LANES), dtype=jnp.float32)
    slab = slab.at[ROW_X:ROW_X + B, 0:T].set(x2)
    slab = slab.at[ROW_WIH:ROW_WIH + 1, 0:H4].set(w_ih)
    slab = slab.at[ROW_WHH:ROW_WHH + H, 0:H4].set(w_hh)
    slab = slab.at[ROW_BIAS:ROW_BIAS + 1, 0:H4].set(b)
    slab = slab.at[ROW_BIAS:ROW_BIAS + 1, H4:H4 + C].set(b_fc)
    slab = slab.at[ROW_WFC:ROW_WFC + H, 0:C].set(w_fc)
    return slab


# ------------------------------- fused forward ------------------------------
@jax.jit
def bayesian_nn_forward(key, x):
    """x: (B, T, I) with I == 1 (PyTorch batch_first layout).

    Resamples the Bayesian weights (blitz semantics: new sample every forward)
    and runs the Pallas kernel, all inside one XLA dispatch.
    """
    assert x.shape == (B, T, INPUT_SIZE), x.shape
    w_ih, w_hh, b, w_fc, b_fc = make_params(key)
    x2 = x.reshape(B, T)                      # drop the lane-width-1 input dim
    slab = pack_slab(x2, w_ih, w_hh, b, w_fc, b_fc)

    vmem_spec = pl.BlockSpec(memory_space=pltpu.MemorySpace.VMEM)
    return pl.pallas_call(
        bayesian_nn_kernel,
        out_shape=jax.ShapeDtypeStruct((B, C), jnp.float32),
        in_specs=[vmem_spec],
        out_specs=vmem_spec,
    )(slab)


if __name__ == "__main__":
    key = jax.random.PRNGKey(0)
    k_x, k_w = jax.random.split(key)

    x = jax.random.normal(k_x, (BATCH, SEQ_LENGTH, INPUT_SIZE),
                          dtype=jnp.float32)

    out = bayesian_nn_forward(k_w, x)
    out = jax.block_until_ready(out)

    assert out.shape == (BATCH, NUM_CLASSES), out.shape
    assert out.dtype == jnp.float32
    print("KERNEL_OK")
</pallas_src>

<mosaic_0001>
module attributes {stable_mosaic.version = 11 : i64} {
  func.func @bayesian_nn_kernel(%arg0: memref<8x128xf32, #tpu.memory_space<vmem>>, %arg1: memref<2x1xf32, #tpu.memory_space<vmem>>) attributes {dimension_semantics = [], scalar_prefetch = 0 : i64, scratch_operands = 0 : i64, tpu.core_type = #tpu.core_type<tc>} {
    %c0 = arith.constant 0 : index
    %c0_0 = arith.constant 0 : index
    %0 = vector.load %arg0[%c0, %c0_0] : memref<8x128xf32, #tpu.memory_space<vmem>>, vector<8x128xf32>
    %1 = vector.extract_strided_slice %0 {offsets = [0, 0], sizes = [2, 4], strides = [1, 1]} : vector<8x128xf32> to vector<2x4xf32>
    %2 = vector.extract_strided_slice %0 {offsets = [2, 0], sizes = [1, 8], strides = [1, 1]} : vector<8x128xf32> to vector<1x8xf32>
    %3 = vector.extract_strided_slice %0 {offsets = [3, 0], sizes = [2, 8], strides = [1, 1]} : vector<8x128xf32> to vector<2x8xf32>
    %4 = vector.extract_strided_slice %0 {offsets = [5, 0], sizes = [1, 8], strides = [1, 1]} : vector<8x128xf32> to vector<1x8xf32>
    %5 = vector.extract_strided_slice %0 {offsets = [5, 8], sizes = [1, 1], strides = [1, 1]} : vector<8x128xf32> to vector<1x1xf32>
    %6 = vector.extract_strided_slice %0 {offsets = [6, 0], sizes = [2, 1], strides = [1, 1]} : vector<8x128xf32> to vector<2x1xf32>
    %7 = vector.shape_cast %2 : vector<1x8xf32> to vector<1x8xf32>
    %8 = vector.broadcast %7 : vector<1x8xf32> to vector<2x8xf32>
    %9 = vector.shape_cast %4 : vector<1x8xf32> to vector<1x8xf32>
    %10 = vector.broadcast %9 : vector<1x8xf32> to vector<2x8xf32>
    %11 = vector.extract_strided_slice %3 {offsets = [0, 0], sizes = [1, 8], strides = [1, 1]} : vector<2x8xf32> to vector<1x8xf32>
    %12 = vector.shape_cast %11 : vector<1x8xf32> to vector<1x8xf32>
    %13 = vector.broadcast %12 : vector<1x8xf32> to vector<2x8xf32>
    %14 = vector.extract_strided_slice %3 {offsets = [1, 0], sizes = [1, 8], strides = [1, 1]} : vector<2x8xf32> to vector<1x8xf32>
    %15 = vector.shape_cast %14 : vector<1x8xf32> to vector<1x8xf32>
    %16 = vector.broadcast %15 : vector<1x8xf32> to vector<2x8xf32>
    %17 = vector.extract_strided_slice %6 {offsets = [0, 0], sizes = [1, 1], strides = [1, 1]} : vector<2x1xf32> to vector<1x1xf32>
    %18 = vector.shape_cast %17 : vector<1x1xf32> to vector<1x1xf32>
    %19 = vector.broadcast %18 : vector<1x1xf32> to vector<2x1xf32>
    %20 = vector.extract_strided_slice %6 {offsets = [1, 0], sizes = [1, 1], strides = [1, 1]} : vector<2x1xf32> to vector<1x1xf32>
    %21 = vector.shape_cast %20 : vector<1x1xf32> to vector<1x1xf32>
    %22 = vector.broadcast %21 : vector<1x1xf32> to vector<2x1xf32>
    %23 = vector.shape_cast %5 : vector<1x1xf32> to vector<1x1xf32>
    %24 = vector.broadcast %23 : vector<1x1xf32> to vector<2x1xf32>
    %25 = vector.extract_strided_slice %1 {offsets = [0, 0], sizes = [2, 1], strides = [1, 1]} : vector<2x4xf32> to vector<2x1xf32>
    %26 = vector.broadcast %25 : vector<2x1xf32> to vector<2x8xf32>
    %27 = arith.mulf %26, %8 : vector<2x8xf32>
    %28 = arith.addf %27, %10 : vector<2x8xf32>
    %29 = vector.extract_strided_slice %1 {offsets = [0, 1], sizes = [2, 1], strides = [1, 1]} : vector<2x4xf32> to vector<2x1xf32>
    %30 = vector.broadcast %29 : vector<2x1xf32> to vector<2x8xf32>
    %31 = arith.mulf %30, %8 : vector<2x8xf32>
    %32 = arith.addf %31, %10 : vector<2x8xf32>
    %33 = vector.extract_strided_slice %1 {offsets = [0, 2], sizes = [2, 1], strides = [1, 1]} : vector<2x4xf32> to vector<2x1xf32>
    %34 = vector.broadcast %33 : vector<2x1xf32> to vector<2x8xf32>
    %35 = arith.mulf %34, %8 : vector<2x8xf32>
    %36 = arith.addf %35, %10 : vector<2x8xf32>
    %37 = vector.extract_strided_slice %1 {offsets = [0, 3], sizes = [2, 1], strides = [1, 1]} : vector<2x4xf32> to vector<2x1xf32>
    %38 = vector.broadcast %37 : vector<2x1xf32> to vector<2x8xf32>
    %39 = arith.mulf %38, %8 : vector<2x8xf32>
    %40 = arith.addf %39, %10 : vector<2x8xf32>
    %cst = arith.constant 0.000000e+00 : f32
    %41 = vector.broadcast %cst : f32 to vector<2x2xf32>
    %cst_1 = arith.constant 0.000000e+00 : f32
    %42 = vector.broadcast %cst_1 : f32 to vector<2x2xf32>
    %43 = vector.extract_strided_slice %41 {offsets = [0, 0], sizes = [2, 1], strides = [1, 1]} : vector<2x2xf32> to vector<2x1xf32>
    %44 = vector.broadcast %43 : vector<2x1xf32> to vector<2x8xf32>
    %45 = arith.mulf %44, %13 : vector<2x8xf32>
    %46 = vector.extract_strided_slice %41 {offsets = [0, 1], sizes = [2, 1], strides = [1, 1]} : vector<2x2xf32> to vector<2x1xf32>
    %47 = vector.broadcast %46 : vector<2x1xf32> to vector<2x8xf32>
    %48 = arith.mulf %47, %16 : vector<2x8xf32>
    %49 = arith.addf %45, %48 : vector<2x8xf32>
    %50 = arith.addf %28, %49 : vector<2x8xf32>
    %51 = arith.negf %50 : vector<2x8xf32>
    %52 = math.exp %51 : vector<2x8xf32>
    %cst_2 = arith.constant 1.000000e+00 : f32
    %53 = vector.broadcast %cst_2 : f32 to vector<2x8xf32>
    %54 = arith.addf %53, %52 : vector<2x8xf32>
    %55 = arith.divf %53, %54 : vector<2x8xf32>
    %56 = math.tanh %50 : vector<2x8xf32>
    %57 = vector.extract_strided_slice %55 {offsets = [0, 0], sizes = [2, 2], strides = [1, 1]} : vector<2x8xf32> to vector<2x2xf32>
    %58 = vector.extract_strided_slice %55 {offsets = [0, 2], sizes = [2, 2], strides = [1, 1]} : vector<2x8xf32> to vector<2x2xf32>
    %59 = vector.extract_strided_slice %56 {offsets = [0, 4], sizes = [2, 2], strides = [1, 1]} : vector<2x8xf32> to vector<2x2xf32>
    %60 = vector.extract_strided_slice %55 {offsets = [0, 6], sizes = [2, 2], strides = [1, 1]} : vector<2x8xf32> to vector<2x2xf32>
    %61 = arith.mulf %58, %42 : vector<2x2xf32>
    %62 = arith.mulf %57, %59 : vector<2x2xf32>
    %63 = arith.addf %61, %62 : vector<2x2xf32>
    %64 = math.tanh %63 : vector<2x2xf32>
    %65 = arith.mulf %60, %64 : vector<2x2xf32>
    %66 = vector.extract_strided_slice %65 {offsets = [0, 0], sizes = [2, 1], strides = [1, 1]} : vector<2x2xf32> to vector<2x1xf32>
    %67 = vector.broadcast %66 : vector<2x1xf32> to vector<2x8xf32>
    %68 = arith.mulf %67, %13 : vector<2x8xf32>
    %69 = vector.extract_strided_slice %65 {offsets = [0, 1], sizes = [2, 1], strides = [1, 1]} : vector<2x2xf32> to vector<2x1xf32>
    %70 = vector.broadcast %69 : vector<2x1xf32> to vector<2x8xf32>
    %71 = arith.mulf %70, %16 : vector<2x8xf32>
    %72 = arith.addf %68, %71 : vector<2x8xf32>
    %73 = arith.addf %32, %72 : vector<2x8xf32>
    %74 = arith.negf %73 : vector<2x8xf32>
    %75 = math.exp %74 : vector<2x8xf32>
    %cst_3 = arith.constant 1.000000e+00 : f32
    %76 = vector.broadcast %cst_3 : f32 to vector<2x8xf32>
    %77 = arith.addf %76, %75 : vector<2x8xf32>
    %78 = arith.divf %76, %77 : vector<2x8xf32>
    %79 = math.tanh %73 : vector<2x8xf32>
    %80 = vector.extract_strided_slice %78 {offsets = [0, 0], sizes = [2, 2], strides = [1, 1]} : vector<2x8xf32> to vector<2x2xf32>
    %81 = vector.extract_strided_slice %78 {offsets = [0, 2], sizes = [2, 2], strides = [1, 1]} : vector<2x8xf32> to vector<2x2xf32>
    %82 = vector.extract_strided_slice %79 {offsets = [0, 4], sizes = [2, 2], strides = [1, 1]} : vector<2x8xf32> to vector<2x2xf32>
    %83 = vector.extract_strided_slice %78 {offsets = [0, 6], sizes = [2, 2], strides = [1, 1]} : vector<2x8xf32> to vector<2x2xf32>
    %84 = arith.mulf %81, %63 : vector<2x2xf32>
    %85 = arith.mulf %80, %82 : vector<2x2xf32>
    %86 = arith.addf %84, %85 : vector<2x2xf32>
    %87 = math.tanh %86 : vector<2x2xf32>
    %88 = arith.mulf %83, %87 : vector<2x2xf32>
    %89 = vector.extract_strided_slice %88 {offsets = [0, 0], sizes = [2, 1], strides = [1, 1]} : vector<2x2xf32> to vector<2x1xf32>
    %90 = vector.broadcast %89 : vector<2x1xf32> to vector<2x8xf32>
    %91 = arith.mulf %90, %13 : vector<2x8xf32>
    %92 = vector.extract_strided_slice %88 {offsets = [0, 1], sizes = [2, 1], strides = [1, 1]} : vector<2x2xf32> to vector<2x1xf32>
    %93 = vector.broadcast %92 : vector<2x1xf32> to vector<2x8xf32>
    %94 = arith.mulf %93, %16 : vector<2x8xf32>
    %95 = arith.addf %91, %94 : vector<2x8xf32>
    %96 = arith.addf %36, %95 : vector<2x8xf32>
    %97 = arith.negf %96 : vector<2x8xf32>
    %98 = math.exp %97 : vector<2x8xf32>
    %cst_4 = arith.constant 1.000000e+00 : f32
    %99 = vector.broadcast %cst_4 : f32 to vector<2x8xf32>
    %100 = arith.addf %99, %98 : vector<2x8xf32>
    %101 = arith.divf %99, %100 : vector<2x8xf32>
    %102 = math.tanh %96 : vector<2x8xf32>
    %103 = vector.extract_strided_slice %101 {offsets = [0, 0], sizes = [2, 2], strides = [1, 1]} : vector<2x8xf32> to vector<2x2xf32>
    %104 = vector.extract_strided_slice %101 {offsets = [0, 2], sizes = [2, 2], strides = [1, 1]} : vector<2x8xf32> to vector<2x2xf32>
    %105 = vector.extract_strided_slice %102 {offsets = [0, 4], sizes = [2, 2], strides = [1, 1]} : vector<2x8xf32> to vector<2x2xf32>
    %106 = vector.extract_strided_slice %101 {offsets = [0, 6], sizes = [2, 2], strides = [1, 1]} : vector<2x8xf32> to vector<2x2xf32>
    %107 = arith.mulf %104, %86 : vector<2x2xf32>
    %108 = arith.mulf %103, %105 : vector<2x2xf32>
    %109 = arith.addf %107, %108 : vector<2x2xf32>
    %110 = math.tanh %109 : vector<2x2xf32>
    %111 = arith.mulf %106, %110 : vector<2x2xf32>
    %112 = vector.extract_strided_slice %111 {offsets = [0, 0], sizes = [2, 1], strides = [1, 1]} : vector<2x2xf32> to vector<2x1xf32>
    %113 = vector.broadcast %112 : vector<2x1xf32> to vector<2x8xf32>
    %114 = arith.mulf %113, %13 : vector<2x8xf32>
    %115 = vector.extract_strided_slice %111 {offsets = [0, 1], sizes = [2, 1], strides = [1, 1]} : vector<2x2xf32> to vector<2x1xf32>
    %116 = vector.broadcast %115 : vector<2x1xf32> to vector<2x8xf32>
    %117 = arith.mulf %116, %16 : vector<2x8xf32>
    %118 = arith.addf %114, %117 : vector<2x8xf32>
    %119 = arith.addf %40, %118 : vector<2x8xf32>
    %120 = arith.negf %119 : vector<2x8xf32>
    %121 = math.exp %120 : vector<2x8xf32>
    %cst_5 = arith.constant 1.000000e+00 : f32
    %122 = vector.broadcast %cst_5 : f32 to vector<2x8xf32>
    %123 = arith.addf %122, %121 : vector<2x8xf32>
    %124 = arith.divf %122, %123 : vector<2x8xf32>
    %125 = math.tanh %119 : vector<2x8xf32>
    %126 = vector.extract_strided_slice %124 {offsets = [0, 0], sizes = [2, 2], strides = [1, 1]} : vector<2x8xf32> to vector<2x2xf32>
    %127 = vector.extract_strided_slice %124 {offsets = [0, 2], sizes = [2, 2], strides = [1, 1]} : vector<2x8xf32> to vector<2x2xf32>
    %128 = vector.extract_strided_slice %125 {offsets = [0, 4], sizes = [2, 2], strides = [1, 1]} : vector<2x8xf32> to vector<2x2xf32>
    %129 = vector.extract_strided_slice %124 {offsets = [0, 6], sizes = [2, 2], strides = [1, 1]} : vector<2x8xf32> to vector<2x2xf32>
    %130 = arith.mulf %127, %109 : vector<2x2xf32>
    %131 = arith.mulf %126, %128 : vector<2x2xf32>
    %132 = arith.addf %130, %131 : vector<2x2xf32>
    %133 = math.tanh %132 : vector<2x2xf32>
    %134 = arith.mulf %129, %133 : vector<2x2xf32>
    %135 = vector.extract_strided_slice %134 {offsets = [0, 0], sizes = [2, 1], strides = [1, 1]} : vector<2x2xf32> to vector<2x1xf32>
    %136 = arith.mulf %135, %19 : vector<2x1xf32>
    %137 = arith.addf %24, %136 : vector<2x1xf32>
    %138 = vector.extract_strided_slice %134 {offsets = [0, 1], sizes = [2, 1], strides = [1, 1]} : vector<2x2xf32> to vector<2x1xf32>
    %139 = arith.mulf %138, %22 : vector<2x1xf32>
    %140 = arith.addf %137, %139 : vector<2x1xf32>
    %c0_6 = arith.constant 0 : index
    %c0_7 = arith.constant 0 : index
    %141 = vector.load %arg1[%c0_6, %c0_7] : memref<2x1xf32, #tpu.memory_space<vmem>>, vector<2x1xf32>
    tpu.vector_store %arg1[%c0_6, %c0_7], %140 {strides = array<i32>} : memref<2x1xf32, #tpu.memory_space<vmem>>, vector<2x1xf32>,
    return
  }
}

</mosaic_0001>

<llo_original>
// kernel: bayesian_nn_forward.1
$region0: #{bayesian_nn_forward.1}
  #allocation0 [shape = 'u32[]', space=smem, size = 0x4, offset = 0x4, fixed_abs, tag = 'smem constant byte address 0x4 - core index']
  #allocation1 [shape = 'u32[72,128]{1,0:T(1,128)}', space=vmem, size = 0x9000, scoped, tag = 'internal scratch']
  %s0 = inlined_call_operand.vmem [shape: f32[8,128], index: 0, kind: input, shape index: {}]
  %s1 = inlined_call_operand.vmem [shape: f32[2,1], index: 1, kind: output, shape index: {}]
  %s2 = sld [smem:[#allocation0]]
  $region14: #{bayesian_nn_forward.1} parent=0
    _
  %s4 = ssub.s32 1, %s2
  %s5 = scalar_select 0, %s4, %s2
  // Predicated region
  $region2: #{bayesian_nn_forward.1} parent=0 // pred_check
    _
  $region3: #{bayesian_nn_forward.1} parent=0 // pred_check_branch
    %7 = sbr.rel (0) target = $region5
  $region4: #{bayesian_nn_forward.1} parent=0 // pred_region
    _
  $region5: #{bayesian_nn_forward.1} parent=0 // pred_fallthru
    _
  %v8 = vld [vmem:[%s0] sm:$0xff]
  %v9 = vperm.slane %v8, 2
  %v10 = vperm.slane %v8, 5
  %v11 = vperm.slane %v8, 3
  %v12 = vperm.slane %v8, 4
  %v13 = vperm.slane %v8, 6
  %v14 = vperm.slane %v8, 7
  %16 = vset.pattern.permute.xlu0 0
  %17 = vperm.xlu0 %16, %v8
  %v18 = vpop.permute.xlu0 %17
  %v20 = vmul.f32 %v18, %v9
  %v21 = vadd.f32 %v20, %v10
  %22 = vset.pattern.permute.xlu0 1
  %23 = vperm.xlu0 %22, %v8
  %v24 = vpop.permute.xlu0 %23
  %v26 = vmul.f32 %v24, %v9
  %v27 = vadd.f32 %v26, %v10
  %28 = vset.pattern.permute.xlu0 2
  %29 = vperm.xlu0 %28, %v8
  %v30 = vpop.permute.xlu0 %29
  %v32 = vmul.f32 %v30, %v9
  %v33 = vadd.f32 %v32, %v10
  %34 = vset.pattern.permute.xlu0 3
  %35 = vperm.xlu0 %34, %v8
  %v36 = vpop.permute.xlu0 %35
  %v38 = vmul.f32 %v36, %v9
  %v39 = vadd.f32 %v38, %v10
  %v40 = vmul.f32 %v11, 0.0
  %v41 = vmul.f32 %v12, 0.0
  %v42 = vadd.f32 %v40, %v41
  %v43 = vadd.f32 %v21, %v42
  %v44 = vxor.u32 %v43, 2147483648
  %v45 = vmul.f32 %v44, 1.442695
  %v46 = vpow.pop %v45
  %v47 = vadd.f32 %v46, 1.0
  %v48 = vrcp.pop %v47
  %v49 = vmul.f32 %v47, %v48
  %v50 = vsub.f32 1.0, %v49
  %v51 = vmul.f32 %v48, %v50
  %v52 = vadd.f32 %v48, %v51
  %vm53 = vweird.f32 %v47
  %vm54 = vweird.f32 %v48
  %vm55 = vmor %vm53, %vm54
  %v56 = vsel %vm55, %v48, %v52
  %v57 = vand.u32 2147483647, %v47
  %vm58 = vcmp.eq.f32.partialorder %v57, 8.507059e+37
  %v59 = vand.u32 %v47, 2147483648
  %v60 = vor.u32 1.1754944e-38, %v59
  %v61 = vsel %vm58, %v60, %v56
  %v62 = vmul.f32 1.0, %v61
  %v63 = vtanh.pop %v43
  %v64 = vmul.f32 %v62, 0.0
  %66 = vrot.lane.b32.xlu0 %v63, 124
  %v67 = vpop.permute.xlu0 %66
  %v69 = vmul.f32 %v62, %v67
  %71 = vrot.lane.b32.xlu0 %v69, 2
  %v72 = vpop.permute.xlu0 %71
  %v74 = vadd.f32 %v64, %v72
  %v75 = vtanh.pop %v74
  %77 = vrot.lane.b32.xlu0 %v75, 4
  %v78 = vpop.permute.xlu0 %77
  %v80 = vmul.f32 %v62, %v78
  %82 = vset.pattern.permute.xlu0 6
  %83 = vperm.xlu0 %82, %v80
  %v84 = vpop.permute.xlu0 %83
  %v86 = vmul.f32 %v84, %v11
  %87 = vset.pattern.permute.xlu0 7
  %88 = vperm.xlu0 %87, %v80
  %v89 = vpop.permute.xlu0 %88
  %v91 = vmul.f32 %v89, %v12
  %v92 = vadd.f32 %v86, %v91
  %v93 = vadd.f32 %v27, %v92
  %v94 = vxor.u32 %v93, 2147483648
  %v95 = vmul.f32 %v94, 1.442695
  %v96 = vpow.pop %v95
  %v97 = vadd.f32 %v96, 1.0
  %v98 = vrcp.pop %v97
  %v99 = vmul.f32 %v97, %v98
  %v100 = vsub.f32 1.0, %v99
  %v101 = vmul.f32 %v98, %v100
  %v102 = vadd.f32 %v98, %v101
  %vm103 = vweird.f32 %v97
  %vm104 = vweird.f32 %v98
  %vm105 = vmor %vm103, %vm104
  %v106 = vsel %vm105, %v98, %v102
  %v107 = vand.u32 2147483647, %v97
  %vm108 = vcmp.eq.f32.partialorder %v107, 8.507059e+37
  %v109 = vand.u32 %v97, 2147483648
  %v110 = vor.u32 1.1754944e-38, %v109
  %v111 = vsel %vm108, %v110, %v106
  %v112 = vmul.f32 1.0, %v111
  %v113 = vtanh.pop %v93
  %v114 = vmul.f32 %v112, %v74
  %116 = vrot.lane.b32.xlu0 %v113, 124
  %v117 = vpop.permute.xlu0 %116
  %v119 = vmul.f32 %v112, %v117
  %121 = vrot.lane.b32.xlu0 %v119, 2
  %v122 = vpop.permute.xlu0 %121
  %v124 = vadd.f32 %v114, %v122
  %v125 = vtanh.pop %v124
  %127 = vrot.lane.b32.xlu0 %v125, 4
  %v128 = vpop.permute.xlu0 %127
  %v130 = vmul.f32 %v112, %v128
  %132 = vset.pattern.permute.xlu0 6
  %133 = vperm.xlu0 %132, %v130
  %v134 = vpop.permute.xlu0 %133
  %v136 = vmul.f32 %v134, %v11
  %137 = vset.pattern.permute.xlu0 7
  %138 = vperm.xlu0 %137, %v130
  %v139 = vpop.permute.xlu0 %138
  %v141 = vmul.f32 %v139, %v12
  %v142 = vadd.f32 %v136, %v141
  %v143 = vadd.f32 %v33, %v142
  %v144 = vxor.u32 %v143, 2147483648
  %v145 = vmul.f32 %v144, 1.442695
  %v146 = vpow.pop %v145
  %v147 = vadd.f32 %v146, 1.0
  %v148 = vrcp.pop %v147
  %v149 = vmul.f32 %v147, %v148
  %v150 = vsub.f32 1.0, %v149
  %v151 = vmul.f32 %v148, %v150
  %v152 = vadd.f32 %v148, %v151
  %vm153 = vweird.f32 %v147
  %vm154 = vweird.f32 %v148
  %vm155 = vmor %vm153, %vm154
  %v156 = vsel %vm155, %v148, %v152
  %v157 = vand.u32 2147483647, %v147
  %vm158 = vcmp.eq.f32.partialorder %v157, 8.507059e+37
  %v159 = vand.u32 %v147, 2147483648
  %v160 = vor.u32 1.1754944e-38, %v159
  %v161 = vsel %vm158, %v160, %v156
  %v162 = vmul.f32 1.0, %v161
  %v163 = vtanh.pop %v143
  %v164 = vmul.f32 %v162, %v124
  %166 = vrot.lane.b32.xlu0 %v163, 124
  %v167 = vpop.permute.xlu0 %166
  %v169 = vmul.f32 %v162, %v167
  %171 = vrot.lane.b32.xlu0 %v169, 2
  %v172 = vpop.permute.xlu0 %171
  %v174 = vadd.f32 %v164, %v172
  %v175 = vtanh.pop %v174
  %177 = vrot.lane.b32.xlu0 %v175, 4
  %v178 = vpop.permute.xlu0 %177
  %v180 = vmul.f32 %v162, %v178
  %182 = vset.pattern.permute.xlu0 6
  %183 = vperm.xlu0 %182, %v180
  %v184 = vpop.permute.xlu0 %183
  %v186 = vmul.f32 %v184, %v11
  %187 = vset.pattern.permute.xlu0 7
  %188 = vperm.xlu0 %187, %v180
  %v189 = vpop.permute.xlu0 %188
  %v191 = vmul.f32 %v189, %v12
  %v192 = vadd.f32 %v186, %v191
  %v193 = vadd.f32 %v39, %v192
  %v194 = vxor.u32 %v193, 2147483648
  %v195 = vmul.f32 %v194, 1.442695
  %v196 = vpow.pop %v195
  %v197 = vadd.f32 %v196, 1.0
  %v198 = vrcp.pop %v197
  %v199 = vmul.f32 %v197, %v198
  %v200 = vsub.f32 1.0, %v199
  %v201 = vmul.f32 %v198, %v200
  %v202 = vadd.f32 %v198, %v201
  %vm203 = vweird.f32 %v197
  %vm204 = vweird.f32 %v198
  %vm205 = vmor %vm203, %vm204
  %v206 = vsel %vm205, %v198, %v202
  %v207 = vand.u32 2147483647, %v197
  %vm208 = vcmp.eq.f32.partialorder %v207, 8.507059e+37
  %v209 = vand.u32 %v197, 2147483648
  %v210 = vor.u32 1.1754944e-38, %v209
  %v211 = vsel %vm208, %v210, %v206
  %v212 = vmul.f32 1.0, %v211
  %v213 = vtanh.pop %v193
  %v214 = vmul.f32 %v212, %v174
  %216 = vrot.lane.b32.xlu0 %v213, 124
  %v217 = vpop.permute.xlu0 %216
  %v219 = vmul.f32 %v212, %v217
  %221 = vrot.lane.b32.xlu0 %v219, 2
  %v222 = vpop.permute.xlu0 %221
  %v224 = vadd.f32 %v214, %v222
  %v225 = vtanh.pop %v224
  %227 = vrot.lane.b32.xlu0 %v225, 4
  %v228 = vpop.permute.xlu0 %227
  %v230 = vmul.f32 %v212, %v228
  %232 = vrot.lane.b32.xlu0 %v13, 6
  %v233 = vpop.permute.xlu0 %232
  %v235 = vmul.f32 %v230, %v233
  %237 = vrot.lane.b32.xlu0 %v235, 2
  %v238 = vpop.permute.xlu0 %237
  %v240 = vadd.f32 %v10, %v238
  %242 = vrot.lane.b32.xlu0 %v14, 7
  %v243 = vpop.permute.xlu0 %242
  %v245 = vmul.f32 %v230, %v243
  %247 = vrot.lane.b32.xlu0 %v245, 1
  %v248 = vpop.permute.xlu0 %247
  %v250 = vadd.f32 %v240, %v248
  %252 = vrot.lane.b32.xlu0 %v250, 120
  %v253 = vpop.permute.xlu0 %252
  %vm255 = vcmask 1024
  %256 = vst.msk [vmem:[%s1] sm:$0x3] %vm255, %v253
  // Predicated region
  $region6: #{bayesian_nn_forward.1} parent=0 // pred_check
    _
  $region7: #{bayesian_nn_forward.1} parent=0 // pred_check_branch
    %258 = sbr.rel (0) target = $region9
  $region8: #{bayesian_nn_forward.1} parent=0 // pred_region
    _
  $region9: #{bayesian_nn_forward.1} parent=0 // pred_fallthru
    _
  // Predicated region
  $region10: #{bayesian_nn_forward.1} parent=0 // pred_check
    _
  $region11: #{bayesian_nn_forward.1} parent=0 // pred_check_branch
    %260 = sbr.rel (0) target = $region13
  $region12: #{bayesian_nn_forward.1} parent=0 // pred_region
    _
  $region13: #{bayesian_nn_forward.1} parent=0 // pred_fallthru
    _

</llo_original>
